<compile_context>
chip_gen: v7x
topology: tpu7x:2x2x1
jax: 0.10.0
libtpu: 0.0.40
codegen_flags: <defaults>
</compile_context>

<pallas_src>
import math
from functools import partial

import jax
import jax.numpy as jnp
from jax.experimental import pallas as pl
from jax.experimental.pallas import tpu as pltpu


def _round_up(x: int, m: int) -> int:
    return ((x + m - 1) // m) * m


def _sawsing_kernel(h_ref, w_ref, b_ref, f0_ref, voice_ref, noise_ref,
                    *, voice_n_mag, log_f0_min, log_f0_max):
    # h_ref: (TM, F)  w_ref: (F, C)  b_ref: (1, C)
    # f0_ref: (TM, 1) voice_ref: (TM, V) noise_ref: (TM, N)
    y = jnp.dot(h_ref[...], w_ref[...],
                preferred_element_type=jnp.float32,
                precision=jax.lax.Precision.HIGHEST)
    y = y + b_ref[...]

    logits = y[:, 0:1]
    f0 = jnp.exp(jax.nn.sigmoid(logits) * (log_f0_max - log_f0_min) + log_f0_min)
    f0_ref[...] = f0.astype(f0_ref.dtype)
    voice_ref[...] = y[:, 1:1 + voice_n_mag].astype(voice_ref.dtype)
    noise_ref[...] = y[:, 1 + voice_n_mag:].astype(noise_ref.dtype)


@partial(jax.jit, static_argnames=("voice_n_mag", "noise_n_mag",
                                   "f0_min", "f0_max", "tm"))
def sawsing_forward(h, weight, bias, *, voice_n_mag, noise_n_mag,
                    f0_min=80.0, f0_max=1000.0, tm=4096):
    """h: (B, T, F). weight: (F, C) (transpose of PyTorch Linear layout). bias: (C,).

    C = 1 + voice_n_mag + noise_n_mag.  Returns the SawSing.forward structure
    ([f0], (), (voice_log_mag,), (noise_log_mag,), ()).
    """
    B, T, F = h.shape
    C = 1 + voice_n_mag + noise_n_mag
    assert weight.shape == (F, C)
    assert bias.shape == (C,)

    M = B * T

    # Sublane multiple for the streamed dtype (8 for f32, 16 for bf16, ...).
    itemsize = jnp.dtype(h.dtype).itemsize
    sub = max(8, 32 // max(itemsize, 1))

    # Row tile: large to amortize per-step overhead, sublane-aligned, but capped
    # near M/2 so the parallel grid axis has >= 2 steps (feeds both v7x cores).
    half = _round_up(max(pl.cdiv(M, 2), sub), sub)
    TM = max(min(tm, half), sub)
    grid = (pl.cdiv(M, TM),)

    h2d = h.reshape(M, F)                           # metadata-only reshape
    w2d = weight.astype(h.dtype)                    # tiny (F, C) array
    b2d = bias.astype(jnp.float32).reshape(1, C)

    kernel = partial(_sawsing_kernel,
                     voice_n_mag=voice_n_mag,
                     log_f0_min=math.log(f0_min),
                     log_f0_max=math.log(f0_max))

    f0_2d, voice_2d, noise_2d = pl.pallas_call(
        kernel,
        out_shape=(
            jax.ShapeDtypeStruct((M, 1), jnp.float32),
            jax.ShapeDtypeStruct((M, voice_n_mag), jnp.float32),
            jax.ShapeDtypeStruct((M, noise_n_mag), jnp.float32),
        ),
        grid_spec=pltpu.PrefetchScalarGridSpec(
            num_scalar_prefetch=0,
            grid=grid,
            in_specs=[
                pl.BlockSpec((TM, F), lambda i: (i, 0)),   # streamed rows
                pl.BlockSpec((F, C), lambda i: (0, 0)),    # resident weight
                pl.BlockSpec((1, C), lambda i: (0, 0)),    # resident bias
            ],
            out_specs=[
                pl.BlockSpec((TM, 1), lambda i: (i, 0)),
                pl.BlockSpec((TM, voice_n_mag), lambda i: (i, 0)),
                pl.BlockSpec((TM, noise_n_mag), lambda i: (i, 0)),
            ],
        ),
        compiler_params=pltpu.CompilerParams(
            dimension_semantics=("parallel",),
        ),
    )(h2d, w2d, b2d)

    f0 = f0_2d.reshape(B, T)
    voice_log_mag = voice_2d.reshape(B, T, voice_n_mag)
    noise_log_mag = noise_2d.reshape(B, T, noise_n_mag)

    # Matches SawSing.forward return structure (learn_voicing=False).
    return ([f0], (), (voice_log_mag,), (noise_log_mag,), ())


def _reference_forward(h, weight, bias, *, voice_n_mag, noise_n_mag,
                       f0_min=80.0, f0_max=1000.0):
    y = jnp.einsum("btf,fc->btc", h, weight, precision="highest") + bias
    logits = y[..., 0]
    sig = jax.nn.sigmoid(logits)
    f0 = jnp.exp(sig * (math.log(f0_max) - math.log(f0_min)) + math.log(f0_min))
    voice = y[..., 1:1 + voice_n_mag]
    noise = y[..., 1 + voice_n_mag:]
    return f0, voice, noise


if __name__ == "__main__":
    B, T, F = 2, 8, 32          # batch, frames, features
    voice_n_mag, noise_n_mag = 8, 8
    C = 1 + voice_n_mag + noise_n_mag

    key = jax.random.PRNGKey(0)
    kh, kw, kb = jax.random.split(key, 3)
    h = jax.random.normal(kh, (B, T, F), dtype=jnp.float32)
    # Deterministic Linear params (uniform +-1/sqrt(F), PyTorch-style bound).
    bound = 1.0 / math.sqrt(F)
    weight = jax.random.uniform(kw, (F, C), jnp.float32, -bound, bound)
    bias = jax.random.uniform(kb, (C,), jnp.float32, -bound, bound)

    out = sawsing_forward(h, weight, bias,
                          voice_n_mag=voice_n_mag, noise_n_mag=noise_n_mag)
    jax.block_until_ready(out)

    f0_params, _, (voice_log_mag,), (noise_log_mag,), _ = out
    f0 = f0_params[0]
    assert f0.shape == (B, T)
    assert voice_log_mag.shape == (B, T, voice_n_mag)
    assert noise_log_mag.shape == (B, T, noise_n_mag)

    f0_ref, voice_ref, noise_ref = _reference_forward(
        h, weight, bias, voice_n_mag=voice_n_mag, noise_n_mag=noise_n_mag)
    assert jnp.allclose(f0, f0_ref, rtol=1e-4, atol=1e-3)
    assert jnp.allclose(voice_log_mag, voice_ref, rtol=1e-5, atol=1e-5)
    assert jnp.allclose(noise_log_mag, noise_ref, rtol=1e-5, atol=1e-5)

    print("KERNEL_OK")
</pallas_src>

<mosaic_0001>
module attributes {stable_mosaic.version = 11 : i64} {
  func.func @_sawsing_kernel(%arg0: i32, %arg1: memref<8x32xf32, #tpu.memory_space<vmem>>, %arg2: memref<32x17xf32, #tpu.memory_space<vmem>>, %arg3: memref<1x17xf32, #tpu.memory_space<vmem>>, %arg4: memref<8x1xf32, #tpu.memory_space<vmem>>, %arg5: memref<8x8xf32, #tpu.memory_space<vmem>>, %arg6: memref<8x8xf32, #tpu.memory_space<vmem>>) attributes {dimension_semantics = [#tpu.dimension_semantics<parallel>], iteration_bounds = array<i64: 2>, scalar_prefetch = 0 : i64, scratch_operands = 0 : i64, tpu.core_type = #tpu.core_type<tc>, window_params = [{transform_indices = @transform_0, window_bounds = array<i64: 8, 32>}, {pipeline_mode = #tpu.pipeline_mode<synchronous>, transform_indices = @transform_1, window_bounds = array<i64: 32, 17>}, {pipeline_mode = #tpu.pipeline_mode<synchronous>, transform_indices = @transform_2, window_bounds = array<i64: 1, 17>}, {transform_indices = @transform_3, window_bounds = array<i64: 8, 1>}, {transform_indices = @transform_4, window_bounds = array<i64: 8, 8>}, {transform_indices = @transform_5, window_bounds = array<i64: 8, 8>}]} {
    %c0 = arith.constant 0 : index
    %c0_0 = arith.constant 0 : index
    %0 = vector.load %arg1[%c0, %c0_0] : memref<8x32xf32, #tpu.memory_space<vmem>>, vector<8x32xf32>
    %c0_1 = arith.constant 0 : index
    %c0_2 = arith.constant 0 : index
    %1 = vector.load %arg2[%c0_1, %c0_2] : memref<32x17xf32, #tpu.memory_space<vmem>>, vector<32x17xf32>
    %cst = arith.constant dense<0.000000e+00> : vector<8x17xf32>
    %2 = tpu.matmul %0, %1, %cst {dimension_numbers = #tpu.dot_dimension_numbers<[1], [0], [0], [1], [0, 0, 1, 1], [], []>, precision = #tpu.contract_precision<fp32>} : vector<8x32xf32>, vector<32x17xf32>, vector<8x17xf32> -> vector<8x17xf32>
    %c0_3 = arith.constant 0 : index
    %c0_4 = arith.constant 0 : index
    %3 = vector.load %arg3[%c0_3, %c0_4] : memref<1x17xf32, #tpu.memory_space<vmem>>, vector<1x17xf32>
    %4 = vector.broadcast %3 : vector<1x17xf32> to vector<8x17xf32>
    %5 = arith.addf %2, %4 : vector<8x17xf32>
    %6 = vector.extract_strided_slice %5 {offsets = [0, 0], sizes = [8, 1], strides = [1, 1]} : vector<8x17xf32> to vector<8x1xf32>
    %7 = arith.negf %6 : vector<8x1xf32>
    %8 = math.exp %7 : vector<8x1xf32>
    %cst_5 = arith.constant 1.000000e+00 : f32
    %9 = vector.broadcast %cst_5 : f32 to vector<8x1xf32>
    %10 = arith.addf %9, %8 : vector<8x1xf32>
    %11 = arith.divf %9, %10 : vector<8x1xf32>
    %cst_6 = arith.constant 2.5257287 : f32
    %12 = vector.broadcast %cst_6 : f32 to vector<8x1xf32>
    %13 = arith.mulf %11, %12 : vector<8x1xf32>
    %cst_7 = arith.constant 4.38202667 : f32
    %14 = vector.broadcast %cst_7 : f32 to vector<8x1xf32>
    %15 = arith.addf %13, %14 : vector<8x1xf32>
    %16 = math.exp %15 : vector<8x1xf32>
    %c0_8 = arith.constant 0 : index
    %c0_9 = arith.constant 0 : index
    %17 = vector.load %arg4[%c0_8, %c0_9] : memref<8x1xf32, #tpu.memory_space<vmem>>, vector<8x1xf32>
    tpu.vector_store %arg4[%c0_8, %c0_9], %16 {strides = array<i32>} : memref<8x1xf32, #tpu.memory_space<vmem>>, vector<8x1xf32>,
    %18 = vector.extract_strided_slice %5 {offsets = [0, 1], sizes = [8, 8], strides = [1, 1]} : vector<8x17xf32> to vector<8x8xf32>
    %c0_10 = arith.constant 0 : index
    %c0_11 = arith.constant 0 : index
    %19 = vector.load %arg5[%c0_10, %c0_11] : memref<8x8xf32, #tpu.memory_space<vmem>>, vector<8x8xf32>
    tpu.vector_store %arg5[%c0_10, %c0_11], %18 {strides = array<i32>} : memref<8x8xf32, #tpu.memory_space<vmem>>, vector<8x8xf32>,
    %20 = vector.extract_strided_slice %5 {offsets = [0, 9], sizes = [8, 8], strides = [1, 1]} : vector<8x17xf32> to vector<8x8xf32>
    %c0_12 = arith.constant 0 : index
    %c0_13 = arith.constant 0 : index
    %21 = vector.load %arg6[%c0_12, %c0_13] : memref<8x8xf32, #tpu.memory_space<vmem>>, vector<8x8xf32>
    tpu.vector_store %arg6[%c0_12, %c0_13], %20 {strides = array<i32>} : memref<8x8xf32, #tpu.memory_space<vmem>>, vector<8x8xf32>,
    return
  }
  func.func @transform_0(%arg0: i32) -> (i32, i32) {
    %c0_i32 = arith.constant 0 : i32
    %c0_i32_0 = arith.constant 0 : i32
    return %arg0, %c0_i32 : i32, i32
  }
  func.func @transform_1(%arg0: i32) -> (i32, i32) {
    %c0_i32 = arith.constant 0 : i32
    %c0_i32_0 = arith.constant 0 : i32
    %c0_i32_1 = arith.constant 0 : i32
    return %c0_i32, %c0_i32_0 : i32, i32
  }
  func.func @transform_2(%arg0: i32) -> (i32, i32) {
    %c0_i32 = arith.constant 0 : i32
    %c0_i32_0 = arith.constant 0 : i32
    %c0_i32_1 = arith.constant 0 : i32
    return %c0_i32, %c0_i32_0 : i32, i32
  }
  func.func @transform_3(%arg0: i32) -> (i32, i32) {
    %c0_i32 = arith.constant 0 : i32
    %c0_i32_0 = arith.constant 0 : i32
    return %arg0, %c0_i32 : i32, i32
  }
  func.func @transform_4(%arg0: i32) -> (i32, i32) {
    %c0_i32 = arith.constant 0 : i32
    %c0_i32_0 = arith.constant 0 : i32
    return %arg0, %c0_i32 : i32, i32
  }
  func.func @transform_5(%arg0: i32) -> (i32, i32) {
    %c0_i32 = arith.constant 0 : i32
    %c0_i32_0 = arith.constant 0 : i32
    return %arg0, %c0_i32 : i32, i32
  }
}

</mosaic_0001>

<llo_original>
// kernel: sawsing_forward.1
$region0: #{sawsing_forward.1}
  #allocation0 [shape = 'u32[]', space=smem, size = 0x4, offset = 0x4, fixed_abs, tag = 'smem constant byte address 0x4 - core index']
  #allocation1 [shape = 'u32[144,128]{1,0:T(1,128)}', space=vmem, size = 0x12000, scoped, tag = 'internal scratch']
  %s0 = inlined_call_operand.vmem [shape: f32[16,32], index: 0, kind: input, shape index: {}]
  %s1 = inlined_call_operand.vmem [shape: f32[32,17], index: 1, kind: input, shape index: {}]
  %s2 = inlined_call_operand.vmem [shape: f32[1,17], index: 2, kind: input, shape index: {}]
  %s3 = inlined_call_operand.vmem [shape: f32[16,1], index: 3, kind: output, shape index: {0}]
  %s4 = inlined_call_operand.hbm [shape: f32[16,8], index: 4, kind: output, shape index: {1}]
  %s5 = inlined_call_operand.hbm [shape: f32[16,8], index: 5, kind: output, shape index: {2}]
  %6 = xla_tuple %s3, %s4, %s5
  %s7 = sld [smem:[#allocation0]]
  $region61: #{sawsing_forward.1} parent=0
    _
  %s9 = ssub.s32 1, %s7
  %s10 = scalar_select 0, %s9, %s7
  $region1: #{sawsing_forward.1} parent=0
    #allocation2 [shape = 'u8[8192]{0}', space=vmem, size = 0x2000, scoped, tag = 'output window, operand 1']
    #allocation3 [shape = 's32[2]{0}', space=sflag, size = 0x8, scoped, tag = 'scoped memory for sawsing_forward.1']
    #allocation4 [shape = 'u8[8192]{0}', space=vmem, size = 0x2000, scoped, tag = 'output window, operand 2']
    #allocation5 [shape = 's32[2]{0}', space=sflag, size = 0x8, scoped, tag = 'scoped memory for sawsing_forward.1']
    %11 = vsyncpa [#allocation3], 0
    %s12 = scalar_lea.sflag [#allocation3], 1
    %13 = vsyncpa %s12, 0
    %14 = vsyncpa [#allocation5], 0
    %s15 = scalar_lea.sflag [#allocation5], 1
    %16 = vsyncpa %s15, 0
    loop: start=0, step=1, limit=4
    $region2: #{sawsing_forward.1} parent=1 // loop_pre_header
      _
    $region3: #{sawsing_forward.1} parent=1 // loop_header
      %s18 = sphi 0, %s22
      %p19 = scmp.ge.s32.totalorder %s18, 4
      %s28 = sphi 0, %s30
      %s31 = sphi 0, %s28
      %s32 = sphi 0, %s31
      %s48 = sphi 0, %s32
      %s52 = sphi 0, %s52
      %s54 = sphi 0, %s52
      %s55 = sphi 0, %s54
      %s69 = sphi 0, %s55
      %s73 = sphi 0, %s73
      %s75 = sphi 0, %s73
      %s76 = sphi 0, %s75
      %s90 = sphi 0, %s76
      %s96 = sphi 0, %s98
      %s99 = sphi 0, %s96
      %s100 = sphi 0, %s99
      %s116 = sphi 0, %s100
      %s122 = sphi 0, %s124
      %s125 = sphi 0, %s122
      %s126 = sphi 0, %s125
      %s142 = sphi 0, %s126
      %s148 = sphi 0, %s150
      %s151 = sphi 0, %s148
      %s152 = sphi 0, %s151
      %s168 = sphi 0, %s152
    $region4: #{sawsing_forward.1} parent=1 // loop_header_branch
      %21 = sbr.rel (%p19) target = $region8
    $region5: #{sawsing_forward.1} parent=1 // loop_body
      %s23 = ssub.s32 %s18, 1
      %s24 = ssub.s32 %s18, 2
      %s25 = sadd.s32 %s18, 1
      %s26 = ssub.s32 %s18, %s25
      %p27 = scmp.eq.s32.totalorder %s26, 0
      %s29 = sadd.s32 %s28, 1
      %s30 = scalar_select %p27, %s28, %s29
      %p33 = pneg %p27
      %p34 = scmp.eq.s32.totalorder %s18, 1
      %p35 = por %p33, %p34
      %p36 = scmp.ne.s32.totalorder %s28, %s31
      %p37 = scmp.eq.s32.totalorder %s18, 0
      %p38 = por %p36, %p37
      %p39 = scmp.ne.s32.totalorder %s28, %s31
      %p40 = scmp.eq.s32.totalorder %s23, 1
      %p41 = por %p39, %p40
      %p42 = scmp.ne.s32.totalorder %s31, %s32
      %p43 = scmp.eq.s32.totalorder %s23, 0
      %p44 = por %p42, %p43
      %p45 = scmp.ne.s32.totalorder %s31, %s32
      %p46 = scmp.eq.s32.totalorder %s24, 1
      %p47 = por %p45, %p46
      %p49 = scmp.ne.s32.totalorder %s32, %s48
      %p50 = scmp.eq.s32.totalorder %s24, 0
      %p51 = por %p49, %p50
      %s53 = sadd.s32 %s52, 1
      %p56 = scmp.eq.s32.totalorder %s18, 1
      %p57 = scmp.ne.s32.totalorder %s52, %s54
      %p58 = scmp.eq.s32.totalorder %s18, 0
      %p59 = por %p57, %p58
      %p60 = scmp.ne.s32.totalorder %s52, %s54
      %p61 = scmp.eq.s32.totalorder %s23, 1
      %p62 = por %p60, %p61
      %p63 = scmp.ne.s32.totalorder %s54, %s55
      %p64 = scmp.eq.s32.totalorder %s23, 0
      %p65 = por %p63, %p64
      %p66 = scmp.ne.s32.totalorder %s54, %s55
      %p67 = scmp.eq.s32.totalorder %s24, 1
      %p68 = por %p66, %p67
      %p70 = scmp.ne.s32.totalorder %s55, %s69
      %p71 = scmp.eq.s32.totalorder %s24, 0
      %p72 = por %p70, %p71
      %s74 = sadd.s32 %s73, 1
      %p77 = scmp.eq.s32.totalorder %s18, 1
      %p78 = scmp.ne.s32.totalorder %s73, %s75
      %p79 = scmp.eq.s32.totalorder %s18, 0
      %p80 = por %p78, %p79
      %p81 = scmp.ne.s32.totalorder %s73, %s75
      %p82 = scmp.eq.s32.totalorder %s23, 1
      %p83 = por %p81, %p82
      %p84 = scmp.ne.s32.totalorder %s75, %s76
      %p85 = scmp.eq.s32.totalorder %s23, 0
      %p86 = por %p84, %p85
      %p87 = scmp.ne.s32.totalorder %s75, %s76
      %p88 = scmp.eq.s32.totalorder %s24, 1
      %p89 = por %p87, %p88
      %p91 = scmp.ne.s32.totalorder %s76, %s90
      %p92 = scmp.eq.s32.totalorder %s24, 0
      %p93 = por %p91, %p92
      %s94 = ssub.s32 %s18, %s25
      %p95 = scmp.eq.s32.totalorder %s94, 0
      %s97 = sadd.s32 %s96, 1
      %s98 = scalar_select %p95, %s96, %s97
      %p101 = pneg %p95
      %p102 = scmp.eq.s32.totalorder %s18, 1
      %p103 = por %p101, %p102
      %p104 = scmp.ne.s32.totalorder %s96, %s99
      %p105 = scmp.eq.s32.totalorder %s18, 0
      %p106 = por %p104, %p105
      %p107 = scmp.ne.s32.totalorder %s96, %s99
      %p108 = scmp.eq.s32.totalorder %s23, 1
      %p109 = por %p107, %p108
      %p110 = scmp.ne.s32.totalorder %s99, %s100
      %p111 = scmp.eq.s32.totalorder %s23, 0
      %p112 = por %p110, %p111
      %p113 = scmp.ne.s32.totalorder %s99, %s100
      %p114 = scmp.eq.s32.totalorder %s24, 1
      %p115 = por %p113, %p114
      %p117 = scmp.ne.s32.totalorder %s100, %s116
      %p118 = scmp.eq.s32.totalorder %s24, 0
      %p119 = por %p117, %p118
      %s120 = ssub.s32 %s18, %s25
      %p121 = scmp.eq.s32.totalorder %s120, 0
      %s123 = sadd.s32 %s122, 1
      %s124 = scalar_select %p121, %s122, %s123
      %p127 = pneg %p121
      %p128 = scmp.eq.s32.totalorder %s18, 1
      %p129 = por %p127, %p128
      %p130 = scmp.ne.s32.totalorder %s122, %s125
      %p131 = scmp.eq.s32.totalorder %s18, 0
      %p132 = por %p130, %p131
      %p133 = scmp.ne.s32.totalorder %s122, %s125
      %p134 = scmp.eq.s32.totalorder %s23, 1
      %p135 = por %p133, %p134
      %p136 = scmp.ne.s32.totalorder %s125, %s126
      %p137 = scmp.eq.s32.totalorder %s23, 0
      %p138 = por %p136, %p137
      %p139 = scmp.ne.s32.totalorder %s125, %s126
      %p140 = scmp.eq.s32.totalorder %s24, 1
      %p141 = por %p139, %p140
      %p143 = scmp.ne.s32.totalorder %s126, %s142
      %p144 = scmp.eq.s32.totalorder %s24, 0
      %p145 = por %p143, %p144
      %s146 = ssub.s32 %s18, %s25
      %p147 = scmp.eq.s32.totalorder %s146, 0
      %s149 = sadd.s32 %s148, 1
      %s150 = scalar_select %p147, %s148, %s149
      %p153 = pneg %p147
      %p154 = scmp.eq.s32.totalorder %s18, 1
      %p155 = por %p153, %p154
      %p156 = scmp.ne.s32.totalorder %s148, %s151
      %p157 = scmp.eq.s32.totalorder %s18, 0
      %p158 = por %p156, %p157
      %p159 = scmp.ne.s32.totalorder %s148, %s151
      %p160 = scmp.eq.s32.totalorder %s23, 1
      %p161 = por %p159, %p160
      %p162 = scmp.ne.s32.totalorder %s151, %s152
      %p163 = scmp.eq.s32.totalorder %s23, 0
      %p164 = por %p162, %p163
      %p165 = scmp.ne.s32.totalorder %s151, %s152
      %p166 = scmp.eq.s32.totalorder %s24, 1
      %p167 = por %p165, %p166
      %p169 = scmp.ne.s32.totalorder %s152, %s168
      %p170 = scmp.eq.s32.totalorder %s24, 0
      %p171 = por %p169, %p170
      %p172 = scmp.le.s32.totalorder 1, %s18
      %p173 = scmp.lt.s32.totalorder %s18, 3
      %p174 = pnand %p172, %p173
      %p175 = pneg %p174
      // Predicated region
      $region9: #{sawsing_forward.1} parent=5 // pred_check
        _
      $region10: #{sawsing_forward.1} parent=5 // pred_check_branch
        %177 = sbr.rel (%p174) target = $region12
      $region11: #{sawsing_forward.1} parent=5 // pred_region
        %s178 = ssub.s32 %s18, 1
        // Predicated region
        $region13: #{sawsing_forward.1} parent=11 // pred_check
          %p179 = pneg %p65
        $region14: #{sawsing_forward.1} parent=11 // pred_check_branch
          %181 = sbr.rel (%p179) target = $region16
        $region15: #{sawsing_forward.1} parent=11 // pred_region
          _
        $region16: #{sawsing_forward.1} parent=11 // pred_fallthru
          _
        // Predicated region
        $region17: #{sawsing_forward.1} parent=11 // pred_check
          %p182 = pneg %p86
        $region18: #{sawsing_forward.1} parent=11 // pred_check_branch
          %184 = sbr.rel (%p182) target = $region20
        $region19: #{sawsing_forward.1} parent=11 // pred_region
          _
        $region20: #{sawsing_forward.1} parent=11 // pred_fallthru
          _
      $region12: #{sawsing_forward.1} parent=5 // pred_fallthru
        _
      %p185 = scmp.lt.s32.totalorder %s18, 2
      // Predicated region
      $region21: #{sawsing_forward.1} parent=5 // pred_check
        %p186 = pneg %p185
      $region22: #{sawsing_forward.1} parent=5 // pred_check_branch
        %188 = sbr.rel (%p186) target = $region24
      $region23: #{sawsing_forward.1} parent=5 // pred_region
        // Predicated region
        $region25: #{sawsing_forward.1} parent=23 // pred_check
          %p189 = pneg %p38
        $region26: #{sawsing_forward.1} parent=23 // pred_check_branch
          %191 = sbr.rel (%p189) target = $region28
        $region27: #{sawsing_forward.1} parent=23 // pred_region
          %p192 = scmp.lt.s32.totalorder %s18, 1
          %s193 = scalar_select %p192, %s18, 1
          %s194 = smul.addr %s193, 8
          %s195 = scalar_lea.vmem %s0, %s194
        $region28: #{sawsing_forward.1} parent=23 // pred_fallthru
          _
      $region24: #{sawsing_forward.1} parent=5 // pred_fallthru
        _
      %p196 = scmp.le.s32.totalorder 1, %s18
      %p197 = scmp.lt.s32.totalorder %s18, 3
      %p198 = pnand %p196, %p197
      %p199 = pneg %p198
      // Predicated region
      $region29: #{sawsing_forward.1} parent=5 // pred_check
        _
      $region30: #{sawsing_forward.1} parent=5 // pred_check_branch
        %201 = sbr.rel (%p198) target = $region32
      $region31: #{sawsing_forward.1} parent=5 // pred_region
        %s202 = ssub.s32 %s18, 1
        %p203 = scmp.lt.s32.totalorder %s23, 1
        %s204 = scalar_select %p203, %s23, 1
        %s205 = smul.addr %s204, 8
        %s206 = scalar_lea.vmem %s0, %s205
        %p207 = pneg %p44
        %p208 = pneg %p41
        %p209 = pneg %p65
        %p210 = pneg %p62
        %p211 = pneg %p86
        %p212 = pneg %p83
        %p213 = pneg %p112
        %p214 = pneg %p109
        %p215 = scmp.lt.s32.totalorder %s23, 1
        %s216 = scalar_select %p215, %s23, 1
        %s217 = smul.addr %s216, 8
        %s218 = scalar_lea.vmem %s3, %s217
        %p219 = pneg %p138
        %p220 = pneg %p135
        %s221 = sand.u32 %s125, 1
        %s222 = scalar_lea.sflag [#allocation3], %s221
        %s223 = sand.u32 %s125, 1
        %s224 = smul.addr %s223, 8
        %s225 = scalar_lea.vmem [#allocation2], %s224
        %p226 = pneg %p164
        %p227 = pneg %p161
        %s228 = sand.u32 %s151, 1
        %s229 = scalar_lea.sflag [#allocation5], %s228
        %s230 = sand.u32 %s151, 1
        %s231 = smul.addr %s230, 8
        %s232 = scalar_lea.vmem [#allocation4], %s231
        %p233 = scmp.lt.s32.totalorder %s23, 1
        %s234 = scalar_select %p233, %s23, 1
        %s235 = smul.addr %s234, 8
        %s236 = scalar_lea.vmem %s0, %s235
        %p237 = scmp.lt.s32.totalorder %s23, 1
        %s238 = scalar_select %p237, %s23, 1
        %s239 = smul.addr %s238, 8
        %s240 = scalar_lea.vmem %s3, %s239
        %v241 = vld [vmem:[%s236] sm:$0xff]
        %v242 = vld [vmem:[%s1] sm:$0xff]
        %v243 = vld [vmem:[%s1 + $0x8] sm:$0xff]
        %v244 = vld [vmem:[%s1 + $0x10] sm:$0xff]
        %v245 = vld [vmem:[%s1 + $0x18] sm:$0xff]
        %v246 = vld [vmem:[%s2] sm:$0x1]
        %v248 = vlaneseq
        %v249 = vshrl.u32 %v248, 7
        %v250 = vsub.s32 0, %v249
        %v251 = vrot.slane %v246, %v250
        %vm253 = vcmask 261120
        %v255 = vsel %vm253, %v241, 0
        %257 = vmatprep.subr.mxu0 0.0
        %v258 = vand.u32 %v242, 4294901760
        %259 = vmatpush1.msra.mxu0 %v258
        %260 = vmatprep.subr.mxu0 0.0
        %v261 = vand.u32 %v243, 4294901760
        %262 = vmatpush1.msra.mxu0 %v261
        %263 = vmatprep.subr.mxu0 0.0
        %v264 = vand.u32 %v244, 4294901760
        %265 = vmatpush1.msra.mxu0 %v264
        %266 = vmatprep.subr.mxu0 0.0
        %v267 = vand.u32 %v245, 4294901760
        %268 = vmatpush1.msra.mxu0 %v267
        %269 = vmatprep.subr.mxu0 0.0
        %270 = vmatpush1.msra.mxu0 0.0
        %271 = vmatprep.subr.mxu0 0.0
        %272 = vmatpush1.msra.mxu0 0.0
        %273 = vmatprep.subr.mxu0 0.0
        %274 = vmatpush1.msra.mxu0 0.0
        %275 = vmatprep.subr.mxu0 0.0
        %276 = vmatpush1.msra.mxu0 0.0
        %277 = vmatprep.subr.mxu0 0.0
        %278 = vmatpush1.msra.mxu0 0.0
        %279 = vmatprep.subr.mxu0 0.0
        %280 = vmatpush1.msra.mxu0 0.0
        %281 = vmatprep.subr.mxu0 0.0
        %282 = vmatpush1.msra.mxu0 0.0
        %283 = vmatprep.subr.mxu0 0.0
        %284 = vmatpush1.msra.mxu0 0.0
        %285 = vmatprep.subr.mxu0 0.0
        %286 = vmatpush1.msra.mxu0 0.0
        %287 = vmatprep.subr.mxu0 0.0
        %288 = vmatpush1.msra.mxu0 0.0
        %289 = vmatprep.subr.mxu0 0.0
        %290 = vmatpush1.msra.mxu0 0.0
        %291 = vmatprep.subr.mxu0 0.0
        %292 = vmatpush1.msra.mxu0 0.0
        %293 = vmatprep.subr.mxu0 0.0
        %294 = vmatpush1.msra.mxu0 0.0
        %295 = vmatprep.subr.mxu0 0.0
        %296 = vmatpush1.msra.mxu0 0.0
        %297 = vmatprep.subr.mxu0 0.0
        %298 = vmatpush1.msra.mxu0 0.0
        %299 = vmatprep.subr.mxu0 0.0
        %300 = vmatpush1.msra.mxu0 0.0
        %301 = vmatprep.subr.mxu0 0.0
        %302 = vmatpush1.msra.mxu0 0.0
        %303 = vmatprep.subr.mxu0 0.0
        %304 = vmatpush1.msra.mxu0 0.0
        %305 = vmatprep.subr.mxu0 0.0
        %306 = vmatpush1.msra.mxu0 0.0
        %307 = vmatprep.subr.mxu0 0.0
        %308 = vmatpush1.msra.mxu0 0.0
        %309 = vmatprep.subr.mxu0 0.0
        %310 = vmatpush1.msra.mxu0 0.0
        %311 = vmatprep.subr.mxu0 0.0
        %312 = vmatpush1.msra.mxu0 0.0
        %313 = vmatprep.subr.mxu0 0.0
        %314 = vmatpush1.msra.mxu0 0.0
        %315 = vmatprep.subr.mxu0 0.0
        %316 = vmatpush1.msra.mxu0 0.0
        %317 = vmatprep.subr.mxu0 0.0
        %318 = vmatpush1.msra.mxu0 0.0
        %319 = vmatprep.subr.mxu0 0.0
        %320 = vmatpush1.msra.mxu0 0.0
        %321 = vmatprep.subr.mxu0 0.0
        %322 = vmatpush1.msra.mxu0 0.0
        %323 = vmatprep.subr.mxu0 0.0
        %324 = vmatpush1.msra.mxu0 0.0
        %325 = vmatprep.mubr.f32.mxu0 0.0
        %v326 = vand.u32 %v255, 4294901760
        %v327 = vsub.f32 %v255, %v326
        %v328 = vand.u32 %v327, 4294901760
        %v329 = vsub.f32 %v327, %v328
        %v330 = vand.u32 %v329, 4294901760
        %331 = vmatmul.mubr.f32.gmra.mrb[0].mxu0 %v330
        %v332 = vpop.f32.mrb[0].mxu0
        %v333 = vadd.f32 %v251, %v332
        %v334 = vpop.f32.mrb[0].mxu0
        %335 = vdwg.mxu0
        %336 = vmatprep.subr.mxu0 0.0
        %v337 = vand.u32 %v242, 4294901760
        %v338 = vsub.f32 %v242, %v337
        %v339 = vand.u32 %v338, 4294901760
        %v340 = vsub.f32 %v338, %v339
        %v341 = vand.u32 %v340, 4294901760
        %342 = vmatpush1.msra.mxu0 %v341
        %343 = vmatprep.subr.mxu0 0.0
        %v344 = vand.u32 %v243, 4294901760
        %v345 = vsub.f32 %v243, %v344
        %v346 = vand.u32 %v345, 4294901760
        %v347 = vsub.f32 %v345, %v346
        %v348 = vand.u32 %v347, 4294901760
        %349 = vmatpush1.msra.mxu0 %v348
        %350 = vmatprep.subr.mxu0 0.0
        %v351 = vand.u32 %v244, 4294901760
        %v352 = vsub.f32 %v244, %v351
        %v353 = vand.u32 %v352, 4294901760
        %v354 = vsub.f32 %v352, %v353
        %v355 = vand.u32 %v354, 4294901760
        %356 = vmatpush1.msra.mxu0 %v355
        %357 = vmatprep.subr.mxu0 0.0
        %v358 = vand.u32 %v245, 4294901760
        %v359 = vsub.f32 %v245, %v358
        %v360 = vand.u32 %v359, 4294901760
        %v361 = vsub.f32 %v359, %v360
        %v362 = vand.u32 %v361, 4294901760
        %363 = vmatpush1.msra.mxu0 %v362
        %364 = vmatprep.subr.mxu0 0.0
        %365 = vmatpush1.msra.mxu0 0.0
        %366 = vmatprep.subr.mxu0 0.0
        %367 = vmatpush1.msra.mxu0 0.0
        %368 = vmatprep.subr.mxu0 0.0
        %369 = vmatpush1.msra.mxu0 0.0
        %370 = vmatprep.subr.mxu0 0.0
        %371 = vmatpush1.msra.mxu0 0.0
        %372 = vmatprep.subr.mxu0 0.0
        %373 = vmatpush1.msra.mxu0 0.0
        %374 = vmatprep.subr.mxu0 0.0
        %375 = vmatpush1.msra.mxu0 0.0
        %376 = vmatprep.subr.mxu0 0.0
        %377 = vmatpush1.msra.mxu0 0.0
        %378 = vmatprep.subr.mxu0 0.0
        %379 = vmatpush1.msra.mxu0 0.0
        %380 = vmatprep.subr.mxu0 0.0
        %381 = vmatpush1.msra.mxu0 0.0
        %382 = vmatprep.subr.mxu0 0.0
        %383 = vmatpush1.msra.mxu0 0.0
        %384 = vmatprep.subr.mxu0 0.0
        %385 = vmatpush1.msra.mxu0 0.0
        %386 = vmatprep.subr.mxu0 0.0
        %387 = vmatpush1.msra.mxu0 0.0
        %388 = vmatprep.subr.mxu0 0.0
        %389 = vmatpush1.msra.mxu0 0.0
        %390 = vmatprep.subr.mxu0 0.0
        %391 = vmatpush1.msra.mxu0 0.0
        %392 = vmatprep.subr.mxu0 0.0
        %393 = vmatpush1.msra.mxu0 0.0
        %394 = vmatprep.subr.mxu0 0.0
        %395 = vmatpush1.msra.mxu0 0.0
        %396 = vmatprep.subr.mxu0 0.0
        %397 = vmatpush1.msra.mxu0 0.0
        %398 = vmatprep.subr.mxu0 0.0
        %399 = vmatpush1.msra.mxu0 0.0
        %400 = vmatprep.subr.mxu0 0.0
        %401 = vmatpush1.msra.mxu0 0.0
        %402 = vmatprep.subr.mxu0 0.0
        %403 = vmatpush1.msra.mxu0 0.0
        %404 = vmatprep.subr.mxu0 0.0
        %405 = vmatpush1.msra.mxu0 0.0
        %406 = vmatprep.subr.mxu0 0.0
        %407 = vmatpush1.msra.mxu0 0.0
        %408 = vmatprep.subr.mxu0 0.0
        %409 = vmatpush1.msra.mxu0 0.0
        %410 = vmatprep.subr.mxu0 0.0
        %411 = vmatpush1.msra.mxu0 0.0
        %412 = vmatprep.subr.mxu0 0.0
        %413 = vmatpush1.msra.mxu0 0.0
        %414 = vmatprep.subr.mxu0 0.0
        %415 = vmatpush1.msra.mxu0 0.0
        %416 = vmatprep.subr.mxu0 0.0
        %417 = vmatpush1.msra.mxu0 0.0
        %418 = vmatprep.subr.mxu0 0.0
        %419 = vmatpush1.msra.mxu0 0.0
        %420 = vmatprep.mubr.f32.mxu0 0.0
        %v421 = vand.u32 %v255, 4294901760
        %422 = vmatmul.mubr.f32.gmra.mrb[0].mxu0 %v421
        %v423 = vpop.f32.mrb[0].mxu0
        %v424 = vadd.f32 %v333, %v423
        %v425 = vpop.f32.mrb[0].mxu0
        %426 = vdwg.mxu0
        %427 = vmatprep.subr.mxu0 0.0
        %v428 = vand.u32 %v242, 4294901760
        %v429 = vsub.f32 %v242, %v428
        %430 = vmatpush1.msra.mxu0 %v429
        %431 = vmatprep.subr.mxu0 0.0
        %v432 = vand.u32 %v243, 4294901760
        %v433 = vsub.f32 %v243, %v432
        %434 = vmatpush1.msra.mxu0 %v433
        %435 = vmatprep.subr.mxu0 0.0
        %v436 = vand.u32 %v244, 4294901760
        %v437 = vsub.f32 %v244, %v436
        %438 = vmatpush1.msra.mxu0 %v437
        %439 = vmatprep.subr.mxu0 0.0
        %v440 = vand.u32 %v245, 4294901760
        %v441 = vsub.f32 %v245, %v440
        %442 = vmatpush1.msra.mxu0 %v441
        %443 = vmatprep.subr.mxu0 0.0
        %444 = vmatpush1.msra.mxu0 0.0
        %445 = vmatprep.subr.mxu0 0.0
        %446 = vmatpush1.msra.mxu0 0.0
        %447 = vmatprep.subr.mxu0 0.0
        %448 = vmatpush1.msra.mxu0 0.0
        %449 = vmatprep.subr.mxu0 0.0
        %450 = vmatpush1.msra.mxu0 0.0
        %451 = vmatprep.subr.mxu0 0.0
        %452 = vmatpush1.msra.mxu0 0.0
        %453 = vmatprep.subr.mxu0 0.0
        %454 = vmatpush1.msra.mxu0 0.0
        %455 = vmatprep.subr.mxu0 0.0
        %456 = vmatpush1.msra.mxu0 0.0
        %457 = vmatprep.subr.mxu0 0.0
        %458 = vmatpush1.msra.mxu0 0.0
        %459 = vmatprep.subr.mxu0 0.0
        %460 = vmatpush1.msra.mxu0 0.0
        %461 = vmatprep.subr.mxu0 0.0
        %462 = vmatpush1.msra.mxu0 0.0
        %463 = vmatprep.subr.mxu0 0.0
        %464 = vmatpush1.msra.mxu0 0.0
        %465 = vmatprep.subr.mxu0 0.0
        %466 = vmatpush1.msra.mxu0 0.0
        %467 = vmatprep.subr.mxu0 0.0
        %468 = vmatpush1.msra.mxu0 0.0
        %469 = vmatprep.subr.mxu0 0.0
        %470 = vmatpush1.msra.mxu0 0.0
        %471 = vmatprep.subr.mxu0 0.0
        %472 = vmatpush1.msra.mxu0 0.0
        %473 = vmatprep.subr.mxu0 0.0
        %474 = vmatpush1.msra.mxu0 0.0
        %475 = vmatprep.subr.mxu0 0.0
        %476 = vmatpush1.msra.mxu0 0.0
        %477 = vmatprep.subr.mxu0 0.0
        %478 = vmatpush1.msra.mxu0 0.0
        %479 = vmatprep.subr.mxu0 0.0
        %480 = vmatpush1.msra.mxu0 0.0
        %481 = vmatprep.subr.mxu0 0.0
        %482 = vmatpush1.msra.mxu0 0.0
        %483 = vmatprep.subr.mxu0 0.0
        %484 = vmatpush1.msra.mxu0 0.0
        %485 = vmatprep.subr.mxu0 0.0
        %486 = vmatpush1.msra.mxu0 0.0
        %487 = vmatprep.subr.mxu0 0.0
        %488 = vmatpush1.msra.mxu0 0.0
        %489 = vmatprep.subr.mxu0 0.0
        %490 = vmatpush1.msra.mxu0 0.0
        %491 = vmatprep.subr.mxu0 0.0
        %492 = vmatpush1.msra.mxu0 0.0
        %493 = vmatprep.subr.mxu0 0.0
        %494 = vmatpush1.msra.mxu0 0.0
        %495 = vmatprep.subr.mxu0 0.0
        %496 = vmatpush1.msra.mxu0 0.0
        %497 = vmatprep.subr.mxu0 0.0
        %498 = vmatpush1.msra.mxu0 0.0
        %499 = vmatprep.mubr.f32.mxu0 0.0
        %v500 = vand.u32 %v255, 4294901760
        %v501 = vsub.f32 %v255, %v500
        %502 = vmatmul.mubr.f32.gmra.mrb[0].mxu0 %v501
        %v503 = vpop.f32.mrb[0].mxu0
        %v504 = vadd.f32 %v424, %v503
        %v505 = vpop.f32.mrb[0].mxu0
        %506 = vdwg.mxu0
        %507 = vmatprep.subr.mxu0 0.0
        %v508 = vand.u32 %v242, 4294901760
        %509 = vmatpush1.msra.mxu0 %v508
        %510 = vmatprep.subr.mxu0 0.0
        %v511 = vand.u32 %v243, 4294901760
        %512 = vmatpush1.msra.mxu0 %v511
        %513 = vmatprep.subr.mxu0 0.0
        %v514 = vand.u32 %v244, 4294901760
        %515 = vmatpush1.msra.mxu0 %v514
        %516 = vmatprep.subr.mxu0 0.0
        %v517 = vand.u32 %v245, 4294901760
        %518 = vmatpush1.msra.mxu0 %v517
        %519 = vmatprep.subr.mxu0 0.0
        %520 = vmatpush1.msra.mxu0 0.0
        %521 = vmatprep.subr.mxu0 0.0
        %522 = vmatpush1.msra.mxu0 0.0
        %523 = vmatprep.subr.mxu0 0.0
        %524 = vmatpush1.msra.mxu0 0.0
        %525 = vmatprep.subr.mxu0 0.0
        %526 = vmatpush1.msra.mxu0 0.0
        %527 = vmatprep.subr.mxu0 0.0
        %528 = vmatpush1.msra.mxu0 0.0
        %529 = vmatprep.subr.mxu0 0.0
        %530 = vmatpush1.msra.mxu0 0.0
        %531 = vmatprep.subr.mxu0 0.0
        %532 = vmatpush1.msra.mxu0 0.0
        %533 = vmatprep.subr.mxu0 0.0
        %534 = vmatpush1.msra.mxu0 0.0
        %535 = vmatprep.subr.mxu0 0.0
        %536 = vmatpush1.msra.mxu0 0.0
        %537 = vmatprep.subr.mxu0 0.0
        %538 = vmatpush1.msra.mxu0 0.0
        %539 = vmatprep.subr.mxu0 0.0
        %540 = vmatpush1.msra.mxu0 0.0
        %541 = vmatprep.subr.mxu0 0.0
        %542 = vmatpush1.msra.mxu0 0.0
        %543 = vmatprep.subr.mxu0 0.0
        %544 = vmatpush1.msra.mxu0 0.0
        %545 = vmatprep.subr.mxu0 0.0
        %546 = vmatpush1.msra.mxu0 0.0
        %547 = vmatprep.subr.mxu0 0.0
        %548 = vmatpush1.msra.mxu0 0.0
        %549 = vmatprep.subr.mxu0 0.0
        %550 = vmatpush1.msra.mxu0 0.0
        %551 = vmatprep.subr.mxu0 0.0
        %552 = vmatpush1.msra.mxu0 0.0
        %553 = vmatprep.subr.mxu0 0.0
        %554 = vmatpush1.msra.mxu0 0.0
        %555 = vmatprep.subr.mxu0 0.0
        %556 = vmatpush1.msra.mxu0 0.0
        %557 = vmatprep.subr.mxu0 0.0
        %558 = vmatpush1.msra.mxu0 0.0
        %559 = vmatprep.subr.mxu0 0.0
        %560 = vmatpush1.msra.mxu0 0.0
        %561 = vmatprep.subr.mxu0 0.0
        %562 = vmatpush1.msra.mxu0 0.0
        %563 = vmatprep.subr.mxu0 0.0
        %564 = vmatpush1.msra.mxu0 0.0
        %565 = vmatprep.subr.mxu0 0.0
        %566 = vmatpush1.msra.mxu0 0.0
        %567 = vmatprep.subr.mxu0 0.0
        %568 = vmatpush1.msra.mxu0 0.0
        %569 = vmatprep.subr.mxu0 0.0
        %570 = vmatpush1.msra.mxu0 0.0
        %571 = vmatprep.subr.mxu0 0.0
        %572 = vmatpush1.msra.mxu0 0.0
        %573 = vmatprep.subr.mxu0 0.0
        %574 = vmatpush1.msra.mxu0 0.0
        %575 = vmatprep.mubr.f32.mxu0 0.0
        %v576 = vand.u32 %v255, 4294901760
        %v577 = vsub.f32 %v255, %v576
        %v578 = vand.u32 %v577, 4294901760
        %579 = vmatmul.mubr.f32.gmra.mrb[0].mxu0 %v578
        %v580 = vpop.f32.mrb[0].mxu0
        %v581 = vadd.f32 %v504, %v580
        %v582 = vpop.f32.mrb[0].mxu0
        %583 = vdwg.mxu0
        %584 = vmatprep.subr.mxu0 0.0
        %v585 = vand.u32 %v242, 4294901760
        %v586 = vsub.f32 %v242, %v585
        %v587 = vand.u32 %v586, 4294901760
        %588 = vmatpush1.msra.mxu0 %v587
        %589 = vmatprep.subr.mxu0 0.0
        %v590 = vand.u32 %v243, 4294901760
        %v591 = vsub.f32 %v243, %v590
        %v592 = vand.u32 %v591, 4294901760
        %593 = vmatpush1.msra.mxu0 %v592
        %594 = vmatprep.subr.mxu0 0.0
        %v595 = vand.u32 %v244, 4294901760
        %v596 = vsub.f32 %v244, %v595
        %v597 = vand.u32 %v596, 4294901760
        %598 = vmatpush1.msra.mxu0 %v597
        %599 = vmatprep.subr.mxu0 0.0
        %v600 = vand.u32 %v245, 4294901760
        %v601 = vsub.f32 %v245, %v600
        %v602 = vand.u32 %v601, 4294901760
        %603 = vmatpush1.msra.mxu0 %v602
        %604 = vmatprep.subr.mxu0 0.0
        %605 = vmatpush1.msra.mxu0 0.0
        %606 = vmatprep.subr.mxu0 0.0
        %607 = vmatpush1.msra.mxu0 0.0
        %608 = vmatprep.subr.mxu0 0.0
        %609 = vmatpush1.msra.mxu0 0.0
        %610 = vmatprep.subr.mxu0 0.0
        %611 = vmatpush1.msra.mxu0 0.0
        %612 = vmatprep.subr.mxu0 0.0
        %613 = vmatpush1.msra.mxu0 0.0
        %614 = vmatprep.subr.mxu0 0.0
        %615 = vmatpush1.msra.mxu0 0.0
        %616 = vmatprep.subr.mxu0 0.0
        %617 = vmatpush1.msra.mxu0 0.0
        %618 = vmatprep.subr.mxu0 0.0
        %619 = vmatpush1.msra.mxu0 0.0
        %620 = vmatprep.subr.mxu0 0.0
        %621 = vmatpush1.msra.mxu0 0.0
        %622 = vmatprep.subr.mxu0 0.0
        %623 = vmatpush1.msra.mxu0 0.0
        %624 = vmatprep.subr.mxu0 0.0
        %625 = vmatpush1.msra.mxu0 0.0
        %626 = vmatprep.subr.mxu0 0.0
        %627 = vmatpush1.msra.mxu0 0.0
        %628 = vmatprep.subr.mxu0 0.0
        %629 = vmatpush1.msra.mxu0 0.0
        %630 = vmatprep.subr.mxu0 0.0
        %631 = vmatpush1.msra.mxu0 0.0
        %632 = vmatprep.subr.mxu0 0.0
        %633 = vmatpush1.msra.mxu0 0.0
        %634 = vmatprep.subr.mxu0 0.0
        %635 = vmatpush1.msra.mxu0 0.0
        %636 = vmatprep.subr.mxu0 0.0
        %637 = vmatpush1.msra.mxu0 0.0
        %638 = vmatprep.subr.mxu0 0.0
        %639 = vmatpush1.msra.mxu0 0.0
        %640 = vmatprep.subr.mxu0 0.0
        %641 = vmatpush1.msra.mxu0 0.0
        %642 = vmatprep.subr.mxu0 0.0
        %643 = vmatpush1.msra.mxu0 0.0
        %644 = vmatprep.subr.mxu0 0.0
        %645 = vmatpush1.msra.mxu0 0.0
        %646 = vmatprep.subr.mxu0 0.0
        %647 = vmatpush1.msra.mxu0 0.0
        %648 = vmatprep.subr.mxu0 0.0
        %649 = vmatpush1.msra.mxu0 0.0
        %650 = vmatprep.subr.mxu0 0.0
        %651 = vmatpush1.msra.mxu0 0.0
        %652 = vmatprep.subr.mxu0 0.0
        %653 = vmatpush1.msra.mxu0 0.0
        %654 = vmatprep.subr.mxu0 0.0
        %655 = vmatpush1.msra.mxu0 0.0
        %656 = vmatprep.subr.mxu0 0.0
        %657 = vmatpush1.msra.mxu0 0.0
        %658 = vmatprep.subr.mxu0 0.0
        %659 = vmatpush1.msra.mxu0 0.0
        %660 = vmatprep.mubr.f32.mxu0 0.0
        %v661 = vand.u32 %v255, 4294901760
        %662 = vmatmul.mubr.f32.gmra.mrb[0].mxu0 %v661
        %v663 = vpop.f32.mrb[0].mxu0
        %v664 = vadd.f32 %v581, %v663
        %v665 = vpop.f32.mrb[0].mxu0
        %666 = vdwg.mxu0
        %667 = vmatprep.subr.mxu0 0.0
        %v668 = vand.u32 %v242, 4294901760
        %669 = vmatpush1.msra.mxu0 %v668
        %670 = vmatprep.subr.mxu0 0.0
        %v671 = vand.u32 %v243, 4294901760
        %672 = vmatpush1.msra.mxu0 %v671
        %673 = vmatprep.subr.mxu0 0.0
        %v674 = vand.u32 %v244, 4294901760
        %675 = vmatpush1.msra.mxu0 %v674
        %676 = vmatprep.subr.mxu0 0.0
        %v677 = vand.u32 %v245, 4294901760
        %678 = vmatpush1.msra.mxu0 %v677
        %679 = vmatprep.subr.mxu0 0.0
        %680 = vmatpush1.msra.mxu0 0.0
        %681 = vmatprep.subr.mxu0 0.0
        %682 = vmatpush1.msra.mxu0 0.0
        %683 = vmatprep.subr.mxu0 0.0
        %684 = vmatpush1.msra.mxu0 0.0
        %685 = vmatprep.subr.mxu0 0.0
        %686 = vmatpush1.msra.mxu0 0.0
        %687 = vmatprep.subr.mxu0 0.0
        %688 = vmatpush1.msra.mxu0 0.0
        %689 = vmatprep.subr.mxu0 0.0
        %690 = vmatpush1.msra.mxu0 0.0
        %691 = vmatprep.subr.mxu0 0.0
        %692 = vmatpush1.msra.mxu0 0.0
        %693 = vmatprep.subr.mxu0 0.0
        %694 = vmatpush1.msra.mxu0 0.0
        %695 = vmatprep.subr.mxu0 0.0
        %696 = vmatpush1.msra.mxu0 0.0
        %697 = vmatprep.subr.mxu0 0.0
        %698 = vmatpush1.msra.mxu0 0.0
        %699 = vmatprep.subr.mxu0 0.0
        %700 = vmatpush1.msra.mxu0 0.0
        %701 = vmatprep.subr.mxu0 0.0
        %702 = vmatpush1.msra.mxu0 0.0
        %703 = vmatprep.subr.mxu0 0.0
        %704 = vmatpush1.msra.mxu0 0.0
        %705 = vmatprep.subr.mxu0 0.0
        %706 = vmatpush1.msra.mxu0 0.0
        %707 = vmatprep.subr.mxu0 0.0
        %708 = vmatpush1.msra.mxu0 0.0
        %709 = vmatprep.subr.mxu0 0.0
        %710 = vmatpush1.msra.mxu0 0.0
        %711 = vmatprep.subr.mxu0 0.0
        %712 = vmatpush1.msra.mxu0 0.0
        %713 = vmatprep.subr.mxu0 0.0
        %714 = vmatpush1.msra.mxu0 0.0
        %715 = vmatprep.subr.mxu0 0.0
        %716 = vmatpush1.msra.mxu0 0.0
        %717 = vmatprep.subr.mxu0 0.0
        %718 = vmatpush1.msra.mxu0 0.0
        %719 = vmatprep.subr.mxu0 0.0
        %720 = vmatpush1.msra.mxu0 0.0
        %721 = vmatprep.subr.mxu0 0.0
        %722 = vmatpush1.msra.mxu0 0.0
        %723 = vmatprep.subr.mxu0 0.0
        %724 = vmatpush1.msra.mxu0 0.0
        %725 = vmatprep.subr.mxu0 0.0
        %726 = vmatpush1.msra.mxu0 0.0
        %727 = vmatprep.subr.mxu0 0.0
        %728 = vmatpush1.msra.mxu0 0.0
        %729 = vmatprep.subr.mxu0 0.0
        %730 = vmatpush1.msra.mxu0 0.0
        %731 = vmatprep.subr.mxu0 0.0
        %732 = vmatpush1.msra.mxu0 0.0
        %733 = vmatprep.subr.mxu0 0.0
        %734 = vmatpush1.msra.mxu0 0.0
        %735 = vmatprep.mubr.f32.mxu0 0.0
        %v736 = vand.u32 %v255, 4294901760
        %737 = vmatmul.mubr.f32.gmra.mrb[0].mxu0 %v736
        %v738 = vpop.f32.mrb[0].mxu0
        %v739 = vadd.f32 %v664, %v738
        %v740 = vpop.f32.mrb[0].mxu0
        %741 = vdwg.mxu0
        %v742 = vxor.u32 %v739, 2147483648
        %v743 = vmul.f32 %v742, 1.442695
        %v744 = vpow.pop %v743
        %v745 = vadd.f32 %v744, 1.0
        %v746 = vrcp.pop %v745
        %v747 = vmul.f32 1.0, %v746
        %v748 = vmul.f32 %v747, 2.5257287
        %v749 = vadd.f32 %v748, 4.3820267
        %v750 = vmul.f32 %v749, 1.442695
        %v751 = vpow.pop %v750
        %vm752 = vcmask 7168
        %753 = vst.msk [vmem:[%s240] sm:$0xff] %vm752, %v751
        %755 = vrot.lane.b32.xlu0 %v739, 127
        %v756 = vpop.permute.xlu0 %755
        %vm758 = vcmask 64512
        %759 = vst.msk [vmem:[%s225] sm:$0xff] %vm758, %v756
        %760 = vrot.lane.b32.xlu0 %v739, 119
        %v761 = vpop.permute.xlu0 %760
        %763 = vst.msk [vmem:[%s232] sm:$0xff] %vm758, %v761
        %p764 = scmp.lt.s32.totalorder %s23, 1
        %s765 = scalar_select %p764, %s23, 1
        %s766 = smul.addr %s765, 8
        %s767 = scalar_lea.vmem %s3, %s766
        %s768 = sand.u32 %s125, 1
        %s769 = scalar_lea.sflag [#allocation3], %s768
        %s770 = sand.u32 %s125, 1
        %s771 = smul.addr %s770, 8
        %s772 = scalar_lea.vmem [#allocation2], %s771
        %s773 = sand.u32 %s151, 1
        %s774 = scalar_lea.sflag [#allocation5], %s773
        %s775 = sand.u32 %s151, 1
        %s776 = smul.addr %s775, 8
        %s777 = scalar_lea.vmem [#allocation4], %s776
        // Predicated region
        $region33: #{sawsing_forward.1} parent=31 // pred_check
          %p778 = pneg %p109
        $region34: #{sawsing_forward.1} parent=31 // pred_check_branch
          %780 = sbr.rel (%p778) target = $region36
        $region35: #{sawsing_forward.1} parent=31 // pred_region
          _
        $region36: #{sawsing_forward.1} parent=31 // pred_fallthru
          _
        // Predicated region
        $region37: #{sawsing_forward.1} parent=31 // pred_check
          %p781 = pneg %p135
        $region38: #{sawsing_forward.1} parent=31 // pred_check_branch
          %783 = sbr.rel (%p781) target = $region40
        $region39: #{sawsing_forward.1} parent=31 // pred_region
          %s785 = ssub.s32 128, 128
          %786 = vsyncadd %s769, %s785
          %s787 = smul.addr %s23, 128
          %s788 = scalar_lea.hbm %s4, %s787
          %s790 = sshll.u32 %s772, 4
          %s791 = int_to_ptr.vmem [resolvable:$true] %s790
          %793 = dma.vmem_to_hbm [thread:$0]  %s791, 128, %s788, %s769
        $region40: #{sawsing_forward.1} parent=31 // pred_fallthru
          _
        // Predicated region
        $region41: #{sawsing_forward.1} parent=31 // pred_check
          %p794 = pneg %p161
        $region42: #{sawsing_forward.1} parent=31 // pred_check_branch
          %796 = sbr.rel (%p794) target = $region44
        $region43: #{sawsing_forward.1} parent=31 // pred_region
          %s798 = ssub.s32 128, 128
          %799 = vsyncadd %s774, %s798
          %s800 = smul.addr %s23, 128
          %s801 = scalar_lea.hbm %s5, %s800
          %s803 = sshll.u32 %s777, 4
          %s804 = int_to_ptr.vmem [resolvable:$true] %s803
          %806 = dma.vmem_to_hbm [thread:$0]  %s804, 128, %s801, %s774
        $region44: #{sawsing_forward.1} parent=31 // pred_fallthru
          _
      $region32: #{sawsing_forward.1} parent=5 // pred_fallthru
        _
      %p807 = scmp.le.s32.totalorder 2, %s18
      // Predicated region
      $region45: #{sawsing_forward.1} parent=5 // pred_check
        %p808 = pneg %p807
      $region46: #{sawsing_forward.1} parent=5 // pred_check_branch
        %810 = sbr.rel (%p808) target = $region48
      $region47: #{sawsing_forward.1} parent=5 // pred_region
        %s811 = ssub.s32 %s18, 2
        // Predicated region
        $region49: #{sawsing_forward.1} parent=47 // pred_check
          %p812 = pneg %p115
        $region50: #{sawsing_forward.1} parent=47 // pred_check_branch
          %814 = sbr.rel (%p812) target = $region52
        $region51: #{sawsing_forward.1} parent=47 // pred_region
          %p815 = scmp.lt.s32.totalorder %s24, 1
          %s816 = scalar_select %p815, %s24, 1
          %s817 = smul.addr %s816, 8
          %s818 = scalar_lea.vmem %s3, %s817
        $region52: #{sawsing_forward.1} parent=47 // pred_fallthru
          _
        // Predicated region
        $region53: #{sawsing_forward.1} parent=47 // pred_check
          %p819 = pneg %p141
        $region54: #{sawsing_forward.1} parent=47 // pred_check_branch
          %821 = sbr.rel (%p819) target = $region56
        $region55: #{sawsing_forward.1} parent=47 // pred_region
          %s822 = sand.u32 %s126, 1
          %s823 = scalar_lea.sflag [#allocation3], %s822
          %s824 = sand.u32 %s126, 1
          %s825 = smul.addr %s824, 8
          %s826 = scalar_lea.vmem [#allocation2], %s825
          %827 = dma.done %s823, 128
        $region56: #{sawsing_forward.1} parent=47 // pred_fallthru
          _
        // Predicated region
        $region57: #{sawsing_forward.1} parent=47 // pred_check
          %p828 = pneg %p167
        $region58: #{sawsing_forward.1} parent=47 // pred_check_branch
          %830 = sbr.rel (%p828) target = $region60
        $region59: #{sawsing_forward.1} parent=47 // pred_region
          %s831 = sand.u32 %s152, 1
          %s832 = scalar_lea.sflag [#allocation5], %s831
          %s833 = sand.u32 %s152, 1
          %s834 = smul.addr %s833, 8
          %s835 = scalar_lea.vmem [#allocation4], %s834
          %836 = dma.done %s832, 128
        $region60: #{sawsing_forward.1} parent=47 // pred_fallthru
          _
      $region48: #{sawsing_forward.1} parent=5 // pred_fallthru
        _
    $region6: #{sawsing_forward.1} parent=1 // loop_footer
      %s22 = sadd.s32 1, %s18
    $region7: #{sawsing_forward.1} parent=1 // loop_footer_branch
      %17 = sbr.rel target = $region3
    $region8: #{sawsing_forward.1} parent=1 // loop_exit
      _
    %837 = vsyncpa [#allocation3], 1
    %s838 = scalar_lea.sflag [#allocation3], 1
    %839 = vsyncpa %s838, 1
    %840 = vsyncpa [#allocation5], 1
    %s841 = scalar_lea.sflag [#allocation5], 1
    %842 = vsyncpa %s841, 1

</llo_original>
